<compile_context>
chip_gen: v6e
topology: v6e:2x2x1
jax: 0.10.0
libtpu: 0.0.40
codegen_flags: <defaults>
</compile_context>

<pallas_src>
import functools

import jax
import jax.numpy as jnp
import numpy as np
from jax.experimental import pallas as pl
from jax.experimental.pallas import tpu as pltpu


# --------------------------------------------------------------------------------------
# Kernel 1a: 2-D grid (full-H blocks, no reduction axis) — preferred path
# --------------------------------------------------------------------------------------
def _vhead_kernel_2d(h_ref, w_ref, out_ref):
    # h_ref: (r_blk, s_blk, H) native dtype; w_ref: (1, 1, H) same dtype (pinned: constant
    # index_map -> no re-DMA across grid steps). Multiply in native dtype, accumulate f32.
    out_ref[...] = jnp.sum(h_ref[...] * w_ref[...], axis=-1, dtype=jnp.float32)


# --------------------------------------------------------------------------------------
# Kernel 1b: 3-D grid fallback (H tiled, reduction axis last, f32 accumulator scratch)
# --------------------------------------------------------------------------------------
def _vhead_kernel_3d(h_ref, w_ref, out_ref, acc_ref):
    k = pl.program_id(2)

    @pl.when(k == 0)
    def _():
        acc_ref[...] = jnp.zeros_like(acc_ref)

    acc_ref[...] += jnp.sum(h_ref[...] * w_ref[...], axis=-1, dtype=jnp.float32)

    @pl.when(k == pl.num_programs(2) - 1)
    def _():
        out_ref[...] = acc_ref[...]


# --------------------------------------------------------------------------------------
# Kernel 2: epilogue — pad indices, divergence window, pairwise logsigmoid loss
# --------------------------------------------------------------------------------------
def _loss_kernel(rew_ref, ids_ref, loss_ref, chosen_ref, rejected_ref,
                 *, pad_id: int, num_pad_at_begin: int):
    rewards = rew_ref[...]                      # (2B, S) f32
    ids = ids_ref[...]                          # (2B, S) int32
    two_b, S = ids.shape
    B = two_b // 2

    # index of the `num_pad_at_begin`-th PAD token per row (S if not enough PADs),
    # computed with (npad+1) masked min-reductions (no (S,S) matmul, no MXU).
    t_all = jax.lax.broadcasted_iota(jnp.int32, (two_b, S), 1)
    pad = ids == pad_id
    idx = jnp.min(jnp.where(pad, t_all, S), axis=1, keepdims=True)     # (2B, 1)
    for _ in range(num_pad_at_begin):
        pad = pad & (t_all > idx)
        idx = jnp.min(jnp.where(pad, t_all, S), axis=1, keepdims=True)

    c_ind = idx[:B]                             # (B, 1)
    r_ind_pad = idx[B:]

    chosen_ids = ids[:B]
    rejected_ids = ids[B:]
    chosen_rewards = rewards[:B]                # (B, S)
    rejected_rewards = rewards[B:]

    t_idx = jax.lax.broadcasted_iota(jnp.int32, (B, S), 1)
    diff = chosen_ids != rejected_ids
    div_first = jnp.min(jnp.where(diff, t_idx, S), axis=1, keepdims=True)
    has_div = div_first < S

    r_ind = jnp.where(has_div, r_ind_pad, c_ind)
    end_ind = jnp.where(has_div, jnp.maximum(c_ind, r_ind_pad), S)
    div_ind = jnp.where(has_div, div_first, S - 1)

    # masked truncated window [div_ind, end_ind)
    mask = ((t_idx >= div_ind) & (t_idx < end_ind)).astype(jnp.float32)

    x = chosen_rewards - rejected_rewards
    # log-sigmoid(x) = min(x, 0) - log1p(exp(-|x|))   (numerically stable)
    logsig = jnp.minimum(x, 0.0) - jnp.log1p(jnp.exp(-jnp.abs(x)))
    cnt = jnp.sum(mask, axis=1, keepdims=True)
    # Guard degenerate pairs (end_ind <= div_ind): contribute 0 instead of propagating
    # the NaN that torch's mean-of-empty-slice would produce.
    per_pair = (jnp.sum(mask * (-logsig), axis=1, keepdims=True) /
                jnp.maximum(cnt, 1.0))                                   # (B, 1)
    loss_ref[...] = jnp.sum(per_pair, keepdims=True) / float(B)          # (1, 1)

    # torch indexes rewards[c_ind - 1]; c_ind == 0 wraps to the last position (index -1).
    c_sel = jnp.where(c_ind == 0, S - 1, c_ind - 1)
    r_sel = jnp.where(r_ind == 0, S - 1, r_ind - 1)
    chosen_sel = (t_idx == c_sel).astype(jnp.float32)
    rejected_sel = (t_idx == r_sel).astype(jnp.float32)
    chosen_ref[...] = jnp.sum(chosen_rewards * chosen_sel, axis=1, keepdims=True)
    rejected_ref[...] = jnp.sum(rejected_rewards * rejected_sel, axis=1, keepdims=True)


# --------------------------------------------------------------------------------------
# Tiling helpers
# --------------------------------------------------------------------------------------
def _vmem_capacity_bytes():
    try:
        return int(pltpu.get_tpu_info().vmem_capacity_bytes)
    except Exception:
        return 64 * 1024 * 1024   # conservative: v7x has 64 MiB per TensorCore


def _usage_bytes(r, s, h, H, itemsize):
    """Pipeline VMEM estimate for one grid step (double-buffer aware, with headroom
    for the f32 compute intermediates of the fused multiply-reduce)."""
    u = 2 * r * s * h * itemsize          # double-buffered hidden tile
    u += r * s * h * 4                    # headroom: f32 product/convert intermediates
    u += 2 * r * s * 4                    # double-buffered f32 output tile
    u += 2 * H * itemsize                 # weight block (tiny)
    if h != H:
        u += r * s * 4                    # f32 accumulator scratch (3-D path)
    return u


def _divisor_cands(n, step):
    """Multiples of `step` that divide n (descending), always including n itself."""
    c = [v for v in range(step, n + 1, step) if n % v == 0]
    if n not in c:
        c.append(n)
    return sorted(set(c), reverse=True)


def _select_tiling(two_b, S, H, itemsize, budget):
    """Return (r_blk, s_blk, h_blk). h_blk == H  =>  2-D grid (no reduction axis)."""
    r_cands = _divisor_cands(two_b, 8)      # out-block sublane dim: mult of 8 or full
    s_cands = _divisor_cands(S, 128)        # out-block lane dim: mult of 128 or full

    # ---- preferred: full-H blocks (contiguous (s_blk, H) slabs per row) ----
    fitting = [(r, s) for r in r_cands for s in s_cands
               if _usage_bytes(r, s, H, H, itemsize) <= budget]
    if fitting:
        # prefer configs whose parallel grid extents can split across v7x's 2 TCs
        par = [(r, s) for (r, s) in fitting
               if pl.cdiv(two_b, r) * pl.cdiv(S, s) >= 2]
        pool = par if par else fitting
        r_blk, s_blk = max(pool, key=lambda rs: (rs[0] * rs[1], rs[1]))
        return r_blk, s_blk, H

    # ---- fallback: tile H (reduction axis, grid axis last) ----
    r_blk = min(r_cands)
    s_blk = min(s_cands)
    h_cands = _divisor_cands(H, 128)
    for h in h_cands:
        if h == H:
            continue
        if _usage_bytes(r_blk, s_blk, h, H, itemsize) <= budget:
            return r_blk, s_blk, h
    return r_blk, s_blk, min(h_cands)       # best effort (unrealistic shapes only)


# --------------------------------------------------------------------------------------
# Wrapper
# --------------------------------------------------------------------------------------
def reward_model_forward(hidden_states, input_ids, v_head_w,
                         pad_id=0, num_padding_at_beginning=0):
    """hidden_states: (2B, S, H) f32/bf16; input_ids: (2B, S) int; v_head_w: (H,)."""
    two_b, S, H = hidden_states.shape
    assert two_b % 2 == 0
    B = two_b // 2
    itemsize = jnp.dtype(hidden_states.dtype).itemsize

    # Stream the weight in the hidden dtype so the MAC stays fused (bf16 VALU on
    # v6e/v7x); accumulation is f32 inside the kernel regardless.
    w3 = v_head_w.reshape(1, 1, H).astype(hidden_states.dtype)

    cap = _vmem_capacity_bytes()
    budget = min(cap // 2, 64 * 1024 * 1024)
    r_blk, s_blk, h_blk = _select_tiling(two_b, S, H, itemsize, budget)
    usage = _usage_bytes(r_blk, s_blk, h_blk, H, itemsize)
    vmem_limit = int(min(cap * 0.9, max(usage + (16 << 20), 32 << 20)))

    flops = 2 * two_b * S * H
    bytes_accessed = (int(two_b) * S * H * itemsize   # hidden stream
                      + H * itemsize                  # weight
                      + two_b * S * 4)                # rewards writeback

    if h_blk == H:
        # 2-D grid: no reduction axis, no accumulator, weight pinned (constant index_map)
        grid = (two_b // r_blk, S // s_blk)
        kernel = _vhead_kernel_2d
        in_specs = [
            pl.BlockSpec((r_blk, s_blk, H), lambda i, j: (i, j, 0)),
            pl.BlockSpec((1, 1, H), lambda i, j: (0, 0, 0)),
        ]
        out_spec = pl.BlockSpec((r_blk, s_blk), lambda i, j: (i, j))
        scratch = []
        dims = ("parallel", "parallel")
    else:
        # 3-D fallback: H tiled, reduction grid axis last
        grid = (two_b // r_blk, S // s_blk, H // h_blk)
        kernel = _vhead_kernel_3d
        in_specs = [
            pl.BlockSpec((r_blk, s_blk, h_blk), lambda i, j, k: (i, j, k)),
            pl.BlockSpec((1, 1, h_blk), lambda i, j, k: (0, 0, k)),
        ]
        out_spec = pl.BlockSpec((r_blk, s_blk), lambda i, j, k: (i, j))
        scratch = [pltpu.VMEM((r_blk, s_blk), jnp.float32)]
        dims = ("parallel", "parallel", "arbitrary")

    rewards = pl.pallas_call(
        kernel,
        out_shape=jax.ShapeDtypeStruct((two_b, S), jnp.float32),
        grid_spec=pltpu.PrefetchScalarGridSpec(
            num_scalar_prefetch=0,
            grid=grid,
            in_specs=in_specs,
            out_specs=out_spec,
            scratch_shapes=scratch,
        ),
        compiler_params=pltpu.CompilerParams(
            dimension_semantics=dims, vmem_limit_bytes=vmem_limit),
        cost_estimate=pl.CostEstimate(flops=flops, transcendentals=0,
                                      bytes_accessed=bytes_accessed),
    )(hidden_states, w3)

    # ---- tiny epilogue on (2B, S) rewards + ids ----
    vmem_spec = pl.BlockSpec(memory_space=pltpu.MemorySpace.VMEM)
    epi_need = two_b * S * 8 + 3 * max(B, 1) * 4
    epi_limit = int(min(cap * 0.9, max(4 * epi_need, 16 << 20)))
    epilogue = functools.partial(_loss_kernel,
                                 pad_id=int(pad_id),
                                 num_pad_at_begin=int(num_padding_at_beginning))
    loss, chosen, rejected = pl.pallas_call(
        epilogue,
        out_shape=(
            jax.ShapeDtypeStruct((1, 1), jnp.float32),
            jax.ShapeDtypeStruct((B, 1), jnp.float32),
            jax.ShapeDtypeStruct((B, 1), jnp.float32),
        ),
        in_specs=[vmem_spec, vmem_spec],
        out_specs=(vmem_spec, vmem_spec, vmem_spec),
        compiler_params=pltpu.CompilerParams(vmem_limit_bytes=epi_limit),
    )(rewards, input_ids.astype(jnp.int32))

    return {
        "loss": loss[0, 0],
        "chosen_mean_scores": chosen[:, 0],
        "rejected_mean_scores": rejected[:, 0],
    }


# --------------------------------------------------------------------------------------
# NumPy reference (mirror of the PyTorch forward per-sample loop)
# --------------------------------------------------------------------------------------
def _reference(hidden, ids, w, pad_id, npad):
    rewards = hidden @ w                                     # (2B, S)
    bs = ids.shape[0] // 2
    S = ids.shape[1]
    c_ids, r_ids = ids[:bs], ids[bs:]
    cr, rr = rewards[:bs], rewards[bs:]
    loss = 0.0
    cms, rms = [], []
    for i in range(bs):
        cid, rid = c_ids[i], r_ids[i]
        c_pads = np.nonzero(cid == pad_id)[0]
        c_ind = int(c_pads[npad]) if len(c_pads) > npad else S
        div = np.nonzero(cid != rid)[0]
        if len(div) == 0:
            end_ind = S
            divergence_ind = S - 1
            r_ind = c_ind
        else:
            r_pads = np.nonzero(rid == pad_id)[0]
            r_ind = int(r_pads[npad]) if len(r_pads) > npad else S
            end_ind = max(c_ind, r_ind)
            divergence_ind = int(div[0])
        ct = cr[i, divergence_ind:end_ind]
        rt = rr[i, divergence_ind:end_ind]
        cms.append(cr[i, c_ind - 1])
        rms.append(rr[i, r_ind - 1])
        x = ct - rt
        logsig = np.minimum(x, 0.0) - np.log1p(np.exp(-np.abs(x)))
        loss += np.mean(-logsig)
    return loss / bs, np.stack(cms), np.stack(rms)


if __name__ == "__main__":
    B, S, H = 2, 8, 32          # bs pairs -> input_ids has 2*B rows
    PAD_ID = 0
    NUM_PAD_AT_BEGIN = 0

    key = jax.random.PRNGKey(0)
    k_h, k_w = jax.random.split(key)

    hidden_f32 = jax.random.normal(k_h, (2 * B, S, H), dtype=jnp.float32)
    v_head_w = (jax.random.normal(k_w, (H,), dtype=jnp.float32) /
                jnp.sqrt(jnp.float32(H)))

    # chosen = first B rows, rejected = last B rows (pair i: row i vs row B+i)
    input_ids = jnp.array(
        [[5, 6, 7, 8, 0, 0, 0, 0],     # chosen 0
         [3, 3, 9, 2, 4, 0, 0, 0],     # chosen 1
         [5, 6, 2, 1, 3, 0, 0, 0],     # rejected 0 (diverges at t=2)
         [3, 3, 9, 2, 4, 0, 0, 0]],    # rejected 1 (identical -> no-divergence path)
        dtype=jnp.int32)

    # ---- f32 path: exact match against the reference ----
    out32 = reward_model_forward(hidden_f32, input_ids, v_head_w,
                                 pad_id=PAD_ID,
                                 num_padding_at_beginning=NUM_PAD_AT_BEGIN)
    jax.block_until_ready(out32["loss"])
    ref_loss, ref_c, ref_r = _reference(np.asarray(hidden_f32), np.asarray(input_ids),
                                        np.asarray(v_head_w), PAD_ID, NUM_PAD_AT_BEGIN)
    np.testing.assert_allclose(np.asarray(out32["loss"]), ref_loss, rtol=1e-4, atol=1e-4)
    np.testing.assert_allclose(np.asarray(out32["chosen_mean_scores"]), ref_c,
                               rtol=1e-4, atol=1e-4)
    np.testing.assert_allclose(np.asarray(out32["rejected_mean_scores"]), ref_r,
                               rtol=1e-4, atol=1e-4)

    # ---- bf16 path (backbone-native): products are bf16-rounded on-chip, so compare
    #      against an f32 reference on bf16-quantized inputs with a bf16-level tolerance.
    hidden_bf16 = hidden_f32.astype(jnp.bfloat16)
    out16 = reward_model_forward(hidden_bf16, input_ids, v_head_w,
                                 pad_id=PAD_ID,
                                 num_padding_at_beginning=NUM_PAD_AT_BEGIN)
    jax.block_until_ready(out16["loss"])
    ref16 = _reference(np.asarray(hidden_bf16.astype(jnp.float32)),
                       np.asarray(input_ids),
                       np.asarray(v_head_w.astype(jnp.bfloat16).astype(jnp.float32)),
                       PAD_ID, NUM_PAD_AT_BEGIN)
    np.testing.assert_allclose(np.asarray(out16["loss"]), ref16[0], rtol=3e-2, atol=3e-2)
    np.testing.assert_allclose(np.asarray(out16["chosen_mean_scores"]), ref16[1],
                               rtol=3e-2, atol=3e-2)
    np.testing.assert_allclose(np.asarray(out16["rejected_mean_scores"]), ref16[2],
                               rtol=3e-2, atol=3e-2)

    print("KERNEL_OK")
</pallas_src>

<mosaic_0001>
module attributes {stable_mosaic.version = 11 : i64} {
  func.func @_vhead_kernel_2d(%arg0: i32, %arg1: i32, %arg2: memref<4x8x32xf32, #tpu.memory_space<vmem>>, %arg3: memref<1x1x32xf32, #tpu.memory_space<vmem>>, %arg4: memref<4x8xf32, #tpu.memory_space<vmem>>) attributes {dimension_semantics = [#tpu.dimension_semantics<parallel>, #tpu.dimension_semantics<parallel>], iteration_bounds = array<i64: 1, 1>, scalar_prefetch = 0 : i64, scratch_operands = 0 : i64, tpu.core_type = #tpu.core_type<tc>, window_params = [{transform_indices = @transform_0, window_bounds = array<i64: 4, 8, 32>}, {pipeline_mode = #tpu.pipeline_mode<synchronous>, transform_indices = @transform_1, window_bounds = array<i64: 1, 1, 32>}, {transform_indices = @transform_2, window_bounds = array<i64: 4, 8>}]} {
    %c0 = arith.constant 0 : index
    %c0_0 = arith.constant 0 : index
    %c0_1 = arith.constant 0 : index
    %0 = vector.load %arg2[%c0, %c0_0, %c0_1] : memref<4x8x32xf32, #tpu.memory_space<vmem>>, vector<4x8x32xf32>
    %c0_2 = arith.constant 0 : index
    %c0_3 = arith.constant 0 : index
    %c0_4 = arith.constant 0 : index
    %1 = vector.load %arg3[%c0_2, %c0_3, %c0_4] : memref<1x1x32xf32, #tpu.memory_space<vmem>>, vector<1x1x32xf32>
    %2 = vector.broadcast %1 : vector<1x1x32xf32> to vector<4x8x32xf32>
    %3 = arith.mulf %0, %2 : vector<4x8x32xf32>
    %cst = arith.constant dense<0.000000e+00> : vector<4x8xf32>
    %4 = vector.multi_reduction <add>, %3, %cst [2] : vector<4x8x32xf32> to vector<4x8xf32>
    %c0_5 = arith.constant 0 : index
    %c0_6 = arith.constant 0 : index
    %5 = vector.load %arg4[%c0_5, %c0_6] : memref<4x8xf32, #tpu.memory_space<vmem>>, vector<4x8xf32>
    tpu.vector_store %arg4[%c0_5, %c0_6], %4 {strides = array<i32>} : memref<4x8xf32, #tpu.memory_space<vmem>>, vector<4x8xf32>,
    return
  }
  func.func @transform_0(%arg0: i32, %arg1: i32) -> (i32, i32, i32) {
    %c0_i32 = arith.constant 0 : i32
    %c0_i32_0 = arith.constant 0 : i32
    return %arg0, %arg1, %c0_i32 : i32, i32, i32
  }
  func.func @transform_1(%arg0: i32, %arg1: i32) -> (i32, i32, i32) {
    %c0_i32 = arith.constant 0 : i32
    %c0_i32_0 = arith.constant 0 : i32
    %c0_i32_1 = arith.constant 0 : i32
    %c0_i32_2 = arith.constant 0 : i32
    return %c0_i32, %c0_i32_0, %c0_i32_1 : i32, i32, i32
  }
  func.func @transform_2(%arg0: i32, %arg1: i32) -> (i32, i32) {
    %c0_i32 = arith.constant 0 : i32
    return %arg0, %arg1 : i32, i32
  }
}

</mosaic_0001>

<llo_original>
// kernel: tpu_custom_call.1
$region0: #{tpu_custom_call.1}
  #allocation0 [shape = 'u32[]', space=smem, size = 0x4, offset = 0x4, fixed_abs, tag = 'smem constant byte address 0x4 - core index']
  #allocation1 [shape = 'u32[144,128]{1,0:T(1,128)}', space=vmem, size = 0x12000, scoped, tag = 'internal scratch']
  %s0 = inlined_call_operand.hbm [shape: f32[4,8,32], index: 0, kind: input, shape index: {}]
  %s1 = inlined_call_operand.vmem [shape: f32[1,1,32], index: 1, kind: input, shape index: {}]
  %s2 = inlined_call_operand.hbm [shape: f32[4,8], index: 2, kind: output, shape index: {}]
  %s3 = sld [smem:[#allocation0]]
  $region22: #{tpu_custom_call.1} parent=0
    _
  %s5 = ssub.s32 1, %s3
  %s6 = scalar_select 0, %s5, %s3
  $region1: #{tpu_custom_call.1} parent=0
    #allocation2 [shape = 'u8[16384]{0}', space=vmem, size = 0x4000, scoped, tag = 'input window, operand 0, single buffered']
    #allocation3 [shape = 's32[1]{0}', space=sflag, size = 0x4, scoped, tag = 'scoped memory for tpu_custom_call.1']
    #allocation4 [shape = 's32[1]{0}', space=sflag, size = 0x4, scoped, tag = 'scoped memory for tpu_custom_call.1']
    #allocation5 [shape = 'u8[2048]{0}', space=vmem, size = 0x800, scoped, tag = 'output window, operand 0, single buffered']
    %7 = vsyncpa [#allocation3], 0
    %8 = vsyncpa [#allocation4], 0
    // Predicated region
    $region2: #{tpu_custom_call.1} parent=1 // pred_check
      _
    $region3: #{tpu_custom_call.1} parent=1 // pred_check_branch
      %10 = sbr.rel (0) target = $region5
    $region4: #{tpu_custom_call.1} parent=1 // pred_region
      %s12 = ssub.s32 512, 512
      %13 = vsyncadd [#allocation3], %s12
      %s14 = sshll.u32 [#allocation2], 4
      %s15 = int_to_ptr.vmem [resolvable:$true] %s14
      %20 = dma.hbm_to_vmem [thread:$0]  %s0, 512, %s15, [#allocation3], 128, 128, 8
    $region5: #{tpu_custom_call.1} parent=1 // pred_fallthru
      _
    // Predicated region
    $region6: #{tpu_custom_call.1} parent=1 // pred_check
      _
    $region7: #{tpu_custom_call.1} parent=1 // pred_check_branch
      %22 = sbr.rel (0) target = $region9
    $region8: #{tpu_custom_call.1} parent=1 // pred_region
      _
    $region9: #{tpu_custom_call.1} parent=1 // pred_fallthru
      _
    // Predicated region
    $region10: #{tpu_custom_call.1} parent=1 // pred_check
      _
    $region11: #{tpu_custom_call.1} parent=1 // pred_check_branch
      %24 = sbr.rel (0) target = $region13
    $region12: #{tpu_custom_call.1} parent=1 // pred_region
      %25 = dma.done [#allocation3], 512
    $region13: #{tpu_custom_call.1} parent=1 // pred_fallthru
      _
    %v26 = vld [vmem:[#allocation2] sm:$0xff]
    %v27 = vld [vmem:[#allocation2 + $0x8] sm:$0xff]
    %v28 = vld [vmem:[#allocation2 + $0x10] sm:$0xff]
    %v29 = vld [vmem:[#allocation2 + $0x18] sm:$0xff]
    %v30 = vld [vmem:[%s1] sm:$0x1]
    %v32 = vlaneseq
    %v33 = vshrl.u32 %v32, 7
    %v34 = vsub.s32 0, %v33
    %v35 = vrot.slane %v30, %v34
    %v37 = vmul.f32 %v26, %v35
    %v38 = vmul.f32 %v27, %v35
    %v39 = vmul.f32 %v28, %v35
    %v40 = vmul.f32 %v29, %v35
    %vm41 = vcmask 261120
    %v42 = vsel %vm41, %v37, 0.0
    %43 = vadd.xlane.f32.xlu0 %v42
    %v44 = vpop.xlane.xlu0 %43
    %v45 = vsel %vm41, %v38, 0.0
    %46 = vadd.xlane.f32.xlu0 %v45
    %v47 = vpop.xlane.xlu0 %46
    %v48 = vsel %vm41, %v39, 0.0
    %49 = vadd.xlane.f32.xlu0 %v48
    %v50 = vpop.xlane.xlu0 %49
    %v51 = vsel %vm41, %v40, 0.0
    %52 = vadd.xlane.f32.xlu0 %v51
    %v53 = vpop.xlane.xlu0 %52
    %v58 = vlaneseq
    %v59 = vand.u32 %v58, 127
    %v60 = vlaneseq
    %v61 = vshrl.u32 %v60, 7
    %v62 = vsub.s32 %v59, %v61
    %v63 = vrot.slane %v44, %v62
    %v64 = vlaneseq
    %v65 = vshrl.u32 %v64, 7
    %v66 = vsub.s32 %v59, %v65
    %v67 = vrot.slane %v47, %v66
    %v68 = vlaneseq
    %v69 = vshrl.u32 %v68, 7
    %v70 = vsub.s32 %v59, %v69
    %v71 = vrot.slane %v50, %v70
    %v72 = vlaneseq
    %v73 = vshrl.u32 %v72, 7
    %v74 = vsub.s32 %v59, %v73
    %v75 = vrot.slane %v53, %v74
    %vm76 = vcmask 1041409
    %v77 = vsel %vm76, %v67, %v63
    %vm78 = vcmask 1042434
    %v79 = vsel %vm78, %v71, %v77
    %vm80 = vcmask 1043459
    %v81 = vsel %vm80, %v75, %v79
    %vm83 = vcmask 60416
    %84 = vst.msk [vmem:[#allocation5] sm:$0xf] %vm83, %v81
    // Predicated region
    $region14: #{tpu_custom_call.1} parent=1 // pred_check
      _
    $region15: #{tpu_custom_call.1} parent=1 // pred_check_branch
      %86 = sbr.rel (0) target = $region17
    $region16: #{tpu_custom_call.1} parent=1 // pred_region
      %s88 = ssub.s32 64, 64
      %89 = vsyncadd [#allocation4], %s88
      %s91 = sshll.u32 [#allocation5], 4
      %s92 = int_to_ptr.vmem [resolvable:$true] %s91
      %94 = dma.vmem_to_hbm [thread:$0]  %s92, 64, %s2, [#allocation4]
    $region17: #{tpu_custom_call.1} parent=1 // pred_fallthru
      _
    // Predicated region
    $region18: #{tpu_custom_call.1} parent=1 // pred_check
      _
    $region19: #{tpu_custom_call.1} parent=1 // pred_check_branch
      %96 = sbr.rel (0) target = $region21
    $region20: #{tpu_custom_call.1} parent=1 // pred_region
      %97 = dma.done [#allocation4], 64
    $region21: #{tpu_custom_call.1} parent=1 // pred_fallthru
      _
    %98 = vsyncpa [#allocation3], 1
    %99 = vsyncpa [#allocation4], 1

</llo_original>
